<compile_context>
chip_gen: v7x
topology: tpu7x:2x2x1
jax: 0.10.0
libtpu: 0.0.40
codegen_flags: <defaults>
</compile_context>

<pallas_src>
import functools

import jax
import jax.numpy as jnp
from jax.experimental import pallas as pl
from jax.experimental.pallas import tpu as pltpu

OBS_DIM = 4          # CartPole-v1 observation space: (4,)
HIDDEN = 64
N_ACTIONS = 2        # CartPole-v1 action space: Discrete(2)
TILE_B_MAX = 4096    # batch tile cap; safe on v5e/v6e/v7x VMEM budgets
FASTPATH_MAX_B = 128 # below this, a fused jnp expression beats kernel overhead


def _round_up(x, m):
    return (x + m - 1) // m * m


def qnet_kernel(x_ref, w1_ref, b1_ref, w2_ref, b2_ref, out_ref):
    # Layer 1: (tile_b, 4) @ (4, 64) on the MXU (f32 accumulate), bias add,
    # tanh on the EUP.
    h = jnp.tanh(
        jnp.dot(x_ref[...], w1_ref[...], preferred_element_type=jnp.float32)
        + b1_ref[...]
    )
    # Layer 2: (tile_b, 64) @ (64, 2) on the MXU; narrow (2-lane) store.
    y = jnp.dot(h, w2_ref[...], preferred_element_type=jnp.float32) + b2_ref[...]
    out_ref[...] = y.astype(out_ref.dtype)


@functools.partial(jax.jit, static_argnames=("tile_b", "force_pallas"))
def qnetwork_forward(x, w1, b1, w2, b2, *, tile_b=None, force_pallas=False):
    """x: (B, OBS_DIM) float32 -> (B, N_ACTIONS) float32 q-values."""
    B = x.shape[0]

    # Fast path: for tiny batches (e.g. act() on a single observation) the
    # kernel is pure launch/DMA overhead; a fused XLA expression is faster.
    if not force_pallas and B < FASTPATH_MAX_B:
        return jnp.tanh(x @ w1 + b1) @ w2 + b2

    if tile_b is None:
        # Split into >=2 tiles (megacore sharding on v7x), cap for VMEM.
        tile_b = min(TILE_B_MAX, max(8, _round_up(pl.cdiv(B, 2), 8)))
    else:
        tile_b = max(8, _round_up(int(tile_b), 8))   # sublane constraint

    grid = (pl.cdiv(B, tile_b),)   # ragged last tile handled by Pallas masking

    return pl.pallas_call(
        qnet_kernel,
        out_shape=jax.ShapeDtypeStruct((B, N_ACTIONS), jnp.float32),
        grid_spec=pltpu.PrefetchScalarGridSpec(
            num_scalar_prefetch=0,
            grid=grid,
            in_specs=[
                pl.BlockSpec((tile_b, OBS_DIM), lambda i: (i, 0)),   # x: batch-tiled
                pl.BlockSpec((OBS_DIM, HIDDEN), lambda i: (0, 0)),   # w1: VMEM-resident
                pl.BlockSpec((1, HIDDEN), lambda i: (0, 0)),         # b1: resident
                pl.BlockSpec((HIDDEN, N_ACTIONS), lambda i: (0, 0)), # w2: resident, unpadded
                pl.BlockSpec((1, N_ACTIONS), lambda i: (0, 0)),      # b2: resident, unpadded
            ],
            out_specs=pl.BlockSpec((tile_b, N_ACTIONS), lambda i: (i, 0)),
        ),
        compiler_params=pltpu.CompilerParams(
            dimension_semantics=("parallel",),   # megacore split on v7x
            # x/out blocks lane-pad to (tile_b, 128) f32 in VMEM; at
            # tile_b=4096 that's 2 MiB each, double-buffered ~8 MiB total.
            vmem_limit_bytes=32 * 1024 * 1024,
        ),
    )(x, w1, b1, w2, b2)


@jax.jit
def act_device(state, w1, b1, w2, b2):
    """Fully on-device: argmax action as int32 (B=1 -> jnp fast path)."""
    q = qnetwork_forward(state.reshape(1, OBS_DIM), w1, b1, w2, b2)
    return jnp.argmax(q[0]).astype(jnp.int32)


def act(state, params):
    """Mirrors QNetWork.act. Only the final int() forces a host sync."""
    return int(act_device(state, *params))


def init_params(key):
    """Deterministic init mimicking nn.Linear's U(-1/sqrt(fan_in), 1/sqrt(fan_in))."""
    k1, k2, k3, k4 = jax.random.split(key, 4)
    bound1 = 1.0 / jnp.sqrt(OBS_DIM)
    bound2 = 1.0 / jnp.sqrt(HIDDEN)
    w1 = jax.random.uniform(k1, (OBS_DIM, HIDDEN), jnp.float32, -bound1, bound1)
    b1 = jax.random.uniform(k2, (1, HIDDEN), jnp.float32, -bound1, bound1)
    w2 = jax.random.uniform(k3, (HIDDEN, N_ACTIONS), jnp.float32, -bound2, bound2)
    b2 = jax.random.uniform(k4, (1, N_ACTIONS), jnp.float32, -bound2, bound2)
    return w1, b1, w2, b2


if __name__ == "__main__":
    key = jax.random.PRNGKey(0)
    pkey, k1, k2, k3 = jax.random.split(key, 4)
    params = init_params(pkey)
    w1, b1, w2, b2 = params

    def ref_fwd(x):
        return jnp.tanh(x @ w1 + b1) @ w2 + b2

    # 1) Small batch forced through the Pallas kernel (single tile).
    x_small = jax.random.normal(k1, (8, OBS_DIM), jnp.float32)
    q_small = jax.block_until_ready(
        qnetwork_forward(x_small, *params, force_pallas=True))
    assert q_small.shape == (8, N_ACTIONS)
    assert jnp.allclose(q_small, ref_fwd(x_small), atol=1e-4, rtol=1e-4), \
        "mismatch vs reference (batch=8, single tile)"

    # 2) Multi-tile grid (>=2 steps -> megacore-splittable on v7x); no
    #    wrapper-side pad or slice of x / output.
    x_med = jax.random.normal(k2, (256, OBS_DIM), jnp.float32)
    q_med = jax.block_until_ready(qnetwork_forward(x_med, *params))
    assert q_med.shape == (256, N_ACTIONS)
    assert jnp.allclose(q_med, ref_fwd(x_med), atol=1e-4, rtol=1e-4), \
        "mismatch vs reference (batch=256, multi-tile)"

    # 3) Ragged last tile: boundary block's OOB writes masked by Pallas.
    x_rag = jax.random.normal(k3, (200, OBS_DIM), jnp.float32)
    q_rag = jax.block_until_ready(qnetwork_forward(x_rag, *params, tile_b=128))
    assert q_rag.shape == (200, N_ACTIONS)
    assert jnp.allclose(q_rag, ref_fwd(x_rag), atol=1e-4, rtol=1e-4), \
        "mismatch vs reference (batch=200, ragged last tile)"

    # 4) act() path: B=1 fast path + device argmax, single host sync.
    a = act(x_small[0], params)
    assert a in (0, 1)

    print("KERNEL_OK")
</pallas_src>

<mosaic_0001>
module attributes {stable_mosaic.version = 11 : i64} {
  func.func @qnet_kernel(%arg0: i32, %arg1: memref<8x4xf32, #tpu.memory_space<vmem>>, %arg2: memref<4x64xf32, #tpu.memory_space<vmem>>, %arg3: memref<1x64xf32, #tpu.memory_space<vmem>>, %arg4: memref<64x2xf32, #tpu.memory_space<vmem>>, %arg5: memref<1x2xf32, #tpu.memory_space<vmem>>, %arg6: memref<8x2xf32, #tpu.memory_space<vmem>>) attributes {dimension_semantics = [#tpu.dimension_semantics<parallel>], iteration_bounds = array<i64: 1>, scalar_prefetch = 0 : i64, scratch_operands = 0 : i64, tpu.core_type = #tpu.core_type<tc>, window_params = [{transform_indices = @transform_0, window_bounds = array<i64: 8, 4>}, {pipeline_mode = #tpu.pipeline_mode<synchronous>, transform_indices = @transform_1, window_bounds = array<i64: 4, 64>}, {pipeline_mode = #tpu.pipeline_mode<synchronous>, transform_indices = @transform_2, window_bounds = array<i64: 1, 64>}, {pipeline_mode = #tpu.pipeline_mode<synchronous>, transform_indices = @transform_3, window_bounds = array<i64: 64, 2>}, {pipeline_mode = #tpu.pipeline_mode<synchronous>, transform_indices = @transform_4, window_bounds = array<i64: 1, 2>}, {transform_indices = @transform_5, window_bounds = array<i64: 8, 2>}]} {
    %c0 = arith.constant 0 : index
    %c0_0 = arith.constant 0 : index
    %0 = vector.load %arg1[%c0, %c0_0] : memref<8x4xf32, #tpu.memory_space<vmem>>, vector<8x4xf32>
    %c0_1 = arith.constant 0 : index
    %c0_2 = arith.constant 0 : index
    %1 = vector.load %arg2[%c0_1, %c0_2] : memref<4x64xf32, #tpu.memory_space<vmem>>, vector<4x64xf32>
    %cst = arith.constant dense<0.000000e+00> : vector<8x64xf32>
    %2 = tpu.matmul %0, %1, %cst {dimension_numbers = #tpu.dot_dimension_numbers<[1], [0], [0], [1], [0, 0, 1, 1], [], []>} : vector<8x4xf32>, vector<4x64xf32>, vector<8x64xf32> -> vector<8x64xf32>
    %c0_3 = arith.constant 0 : index
    %c0_4 = arith.constant 0 : index
    %3 = vector.load %arg3[%c0_3, %c0_4] : memref<1x64xf32, #tpu.memory_space<vmem>>, vector<1x64xf32>
    %4 = vector.broadcast %3 : vector<1x64xf32> to vector<8x64xf32>
    %5 = arith.addf %2, %4 : vector<8x64xf32>
    %6 = math.tanh %5 : vector<8x64xf32>
    %c0_5 = arith.constant 0 : index
    %c0_6 = arith.constant 0 : index
    %7 = vector.load %arg4[%c0_5, %c0_6] : memref<64x2xf32, #tpu.memory_space<vmem>>, vector<64x2xf32>
    %cst_7 = arith.constant dense<0.000000e+00> : vector<8x2xf32>
    %8 = tpu.matmul %6, %7, %cst_7 {dimension_numbers = #tpu.dot_dimension_numbers<[1], [0], [0], [1], [0, 0, 1, 1], [], []>} : vector<8x64xf32>, vector<64x2xf32>, vector<8x2xf32> -> vector<8x2xf32>
    %c0_8 = arith.constant 0 : index
    %c0_9 = arith.constant 0 : index
    %9 = vector.load %arg5[%c0_8, %c0_9] : memref<1x2xf32, #tpu.memory_space<vmem>>, vector<1x2xf32>
    %10 = vector.broadcast %9 : vector<1x2xf32> to vector<8x2xf32>
    %11 = arith.addf %8, %10 : vector<8x2xf32>
    %c0_10 = arith.constant 0 : index
    %c0_11 = arith.constant 0 : index
    %12 = vector.load %arg6[%c0_10, %c0_11] : memref<8x2xf32, #tpu.memory_space<vmem>>, vector<8x2xf32>
    tpu.vector_store %arg6[%c0_10, %c0_11], %11 {strides = array<i32>} : memref<8x2xf32, #tpu.memory_space<vmem>>, vector<8x2xf32>,
    return
  }
  func.func @transform_0(%arg0: i32) -> (i32, i32) {
    %c0_i32 = arith.constant 0 : i32
    %c0_i32_0 = arith.constant 0 : i32
    return %arg0, %c0_i32 : i32, i32
  }
  func.func @transform_1(%arg0: i32) -> (i32, i32) {
    %c0_i32 = arith.constant 0 : i32
    %c0_i32_0 = arith.constant 0 : i32
    %c0_i32_1 = arith.constant 0 : i32
    return %c0_i32, %c0_i32_0 : i32, i32
  }
  func.func @transform_2(%arg0: i32) -> (i32, i32) {
    %c0_i32 = arith.constant 0 : i32
    %c0_i32_0 = arith.constant 0 : i32
    %c0_i32_1 = arith.constant 0 : i32
    return %c0_i32, %c0_i32_0 : i32, i32
  }
  func.func @transform_3(%arg0: i32) -> (i32, i32) {
    %c0_i32 = arith.constant 0 : i32
    %c0_i32_0 = arith.constant 0 : i32
    %c0_i32_1 = arith.constant 0 : i32
    return %c0_i32, %c0_i32_0 : i32, i32
  }
  func.func @transform_4(%arg0: i32) -> (i32, i32) {
    %c0_i32 = arith.constant 0 : i32
    %c0_i32_0 = arith.constant 0 : i32
    %c0_i32_1 = arith.constant 0 : i32
    return %c0_i32, %c0_i32_0 : i32, i32
  }
  func.func @transform_5(%arg0: i32) -> (i32, i32) {
    %c0_i32 = arith.constant 0 : i32
    %c0_i32_0 = arith.constant 0 : i32
    return %arg0, %c0_i32 : i32, i32
  }
}

</mosaic_0001>

<llo_original>
// kernel: qnetwork_forward.1
$region0: #{qnetwork_forward.1}
  #allocation0 [shape = 'u32[]', space=smem, size = 0x4, offset = 0x4, fixed_abs, tag = 'smem constant byte address 0x4 - core index']
  #allocation1 [shape = 'u32[144,128]{1,0:T(1,128)}', space=vmem, size = 0x12000, scoped, tag = 'internal scratch']
  %s0 = inlined_call_operand.vmem [shape: f32[8,4], index: 0, kind: input, shape index: {}]
  %s1 = inlined_call_operand.vmem [shape: f32[4,64], index: 1, kind: input, shape index: {}]
  %s2 = inlined_call_operand.vmem [shape: f32[1,64], index: 2, kind: input, shape index: {}]
  %s3 = inlined_call_operand.vmem [shape: f32[64,2], index: 3, kind: input, shape index: {}]
  %s4 = inlined_call_operand.vmem [shape: f32[1,2], index: 4, kind: input, shape index: {}]
  %s5 = inlined_call_operand.vmem [shape: f32[8,2], index: 5, kind: output, shape index: {}]
  %s6 = sld [smem:[#allocation0]]
  $region30: #{qnetwork_forward.1} parent=0
    _
  %s8 = ssub.s32 1, %s6
  %s9 = scalar_select 0, %s8, %s6
  // Predicated region
  $region2: #{qnetwork_forward.1} parent=0 // pred_check
    _
  $region3: #{qnetwork_forward.1} parent=0 // pred_check_branch
    %11 = sbr.rel (0) target = $region5
  $region4: #{qnetwork_forward.1} parent=0 // pred_region
    _
  $region5: #{qnetwork_forward.1} parent=0 // pred_fallthru
    _
  // Predicated region
  $region6: #{qnetwork_forward.1} parent=0 // pred_check
    _
  $region7: #{qnetwork_forward.1} parent=0 // pred_check_branch
    %13 = sbr.rel (0) target = $region9
  $region8: #{qnetwork_forward.1} parent=0 // pred_region
    _
  $region9: #{qnetwork_forward.1} parent=0 // pred_fallthru
    _
  // Predicated region
  $region10: #{qnetwork_forward.1} parent=0 // pred_check
    _
  $region11: #{qnetwork_forward.1} parent=0 // pred_check_branch
    %15 = sbr.rel (0) target = $region13
  $region12: #{qnetwork_forward.1} parent=0 // pred_region
    _
  $region13: #{qnetwork_forward.1} parent=0 // pred_fallthru
    _
  // Predicated region
  $region14: #{qnetwork_forward.1} parent=0 // pred_check
    _
  $region15: #{qnetwork_forward.1} parent=0 // pred_check_branch
    %17 = sbr.rel (0) target = $region17
  $region16: #{qnetwork_forward.1} parent=0 // pred_region
    _
  $region17: #{qnetwork_forward.1} parent=0 // pred_fallthru
    _
  // Predicated region
  $region18: #{qnetwork_forward.1} parent=0 // pred_check
    _
  $region19: #{qnetwork_forward.1} parent=0 // pred_check_branch
    %19 = sbr.rel (0) target = $region21
  $region20: #{qnetwork_forward.1} parent=0 // pred_region
    _
  $region21: #{qnetwork_forward.1} parent=0 // pred_fallthru
    _
  %v20 = vld [vmem:[%s0] sm:$0xff]
  %v21 = vld [vmem:[%s1] sm:$0xf]
  %v22 = vld [vmem:[%s2] sm:$0x1]
  %v24 = vlaneseq
  %v25 = vshrl.u32 %v24, 7
  %v26 = vsub.s32 0, %v25
  %v27 = vrot.slane %v22, %v26
  %vm29 = vcmask 31744
  %v31 = vsel %vm29, %v20, 0
  %vm33 = vcmask 1043456
  %v35 = vsel %vm33, %v21, 0
  %37 = vmatprep.subr.mxu0 0.0
  %38 = vmatpush1.msra.mxu0 %v35
  %39 = vmatprep.subr.mxu0 0.0
  %40 = vmatpush1.msra.mxu0 0.0
  %41 = vmatprep.subr.mxu0 0.0
  %42 = vmatpush1.msra.mxu0 0.0
  %43 = vmatprep.subr.mxu0 0.0
  %44 = vmatpush1.msra.mxu0 0.0
  %45 = vmatprep.subr.mxu0 0.0
  %46 = vmatpush1.msra.mxu0 0.0
  %47 = vmatprep.subr.mxu0 0.0
  %48 = vmatpush1.msra.mxu0 0.0
  %49 = vmatprep.subr.mxu0 0.0
  %50 = vmatpush1.msra.mxu0 0.0
  %51 = vmatprep.subr.mxu0 0.0
  %52 = vmatpush1.msra.mxu0 0.0
  %53 = vmatprep.subr.mxu0 0.0
  %54 = vmatpush1.msra.mxu0 0.0
  %55 = vmatprep.subr.mxu0 0.0
  %56 = vmatpush1.msra.mxu0 0.0
  %57 = vmatprep.subr.mxu0 0.0
  %58 = vmatpush1.msra.mxu0 0.0
  %59 = vmatprep.subr.mxu0 0.0
  %60 = vmatpush1.msra.mxu0 0.0
  %61 = vmatprep.subr.mxu0 0.0
  %62 = vmatpush1.msra.mxu0 0.0
  %63 = vmatprep.subr.mxu0 0.0
  %64 = vmatpush1.msra.mxu0 0.0
  %65 = vmatprep.subr.mxu0 0.0
  %66 = vmatpush1.msra.mxu0 0.0
  %67 = vmatprep.subr.mxu0 0.0
  %68 = vmatpush1.msra.mxu0 0.0
  %69 = vmatprep.subr.mxu0 0.0
  %70 = vmatpush1.msra.mxu0 0.0
  %71 = vmatprep.subr.mxu0 0.0
  %72 = vmatpush1.msra.mxu0 0.0
  %73 = vmatprep.subr.mxu0 0.0
  %74 = vmatpush1.msra.mxu0 0.0
  %75 = vmatprep.subr.mxu0 0.0
  %76 = vmatpush1.msra.mxu0 0.0
  %77 = vmatprep.subr.mxu0 0.0
  %78 = vmatpush1.msra.mxu0 0.0
  %79 = vmatprep.subr.mxu0 0.0
  %80 = vmatpush1.msra.mxu0 0.0
  %81 = vmatprep.subr.mxu0 0.0
  %82 = vmatpush1.msra.mxu0 0.0
  %83 = vmatprep.subr.mxu0 0.0
  %84 = vmatpush1.msra.mxu0 0.0
  %85 = vmatprep.subr.mxu0 0.0
  %86 = vmatpush1.msra.mxu0 0.0
  %87 = vmatprep.subr.mxu0 0.0
  %88 = vmatpush1.msra.mxu0 0.0
  %89 = vmatprep.subr.mxu0 0.0
  %90 = vmatpush1.msra.mxu0 0.0
  %91 = vmatprep.subr.mxu0 0.0
  %92 = vmatpush1.msra.mxu0 0.0
  %93 = vmatprep.subr.mxu0 0.0
  %94 = vmatpush1.msra.mxu0 0.0
  %95 = vmatprep.subr.mxu0 0.0
  %96 = vmatpush1.msra.mxu0 0.0
  %97 = vmatprep.subr.mxu0 0.0
  %98 = vmatpush1.msra.mxu0 0.0
  %99 = vmatprep.subr.mxu0 0.0
  %100 = vmatpush1.msra.mxu0 0.0
  %101 = vmatprep.mubr.f32.mxu0 0.0
  %102 = vmatmul.mubr.f32.gmra.mrb[0].mxu0 %v31
  %v103 = vpop.f32.mrb[0].mxu0
  %v104 = vadd.f32 %v27, %v103
  %v105 = vpop.f32.mrb[0].mxu0
  %106 = vdwg.mxu0
  %v107 = vtanh.pop %v104
  %v108 = vld [vmem:[%s3] sm:$0xff]
  %v109 = vld [vmem:[%s3 + $0x8] sm:$0xff]
  %v110 = vld [vmem:[%s3 + $0x10] sm:$0xff]
  %v111 = vld [vmem:[%s3 + $0x18] sm:$0xff]
  %v112 = vld [vmem:[%s3 + $0x20] sm:$0xff]
  %v113 = vld [vmem:[%s3 + $0x28] sm:$0xff]
  %v114 = vld [vmem:[%s3 + $0x30] sm:$0xff]
  %v115 = vld [vmem:[%s3 + $0x38] sm:$0xff]
  %v116 = vld [vmem:[%s4] sm:$0x1]
  %v118 = vlaneseq
  %v119 = vshrl.u32 %v118, 7
  %v120 = vsub.s32 0, %v119
  %v121 = vrot.slane %v116, %v120
  %vm123 = vcmask 523264
  %v125 = vsel %vm123, %v107, 0
  %127 = vmatprep.subr.mxu0 0.0
  %128 = vmatpush1.msra.mxu0 %v108
  %129 = vmatprep.subr.mxu0 0.0
  %130 = vmatpush1.msra.mxu0 %v109
  %131 = vmatprep.subr.mxu0 0.0
  %132 = vmatpush1.msra.mxu0 %v110
  %133 = vmatprep.subr.mxu0 0.0
  %134 = vmatpush1.msra.mxu0 %v111
  %135 = vmatprep.subr.mxu0 0.0
  %136 = vmatpush1.msra.mxu0 %v112
  %137 = vmatprep.subr.mxu0 0.0
  %138 = vmatpush1.msra.mxu0 %v113
  %139 = vmatprep.subr.mxu0 0.0
  %140 = vmatpush1.msra.mxu0 %v114
  %141 = vmatprep.subr.mxu0 0.0
  %142 = vmatpush1.msra.mxu0 %v115
  %143 = vmatprep.subr.mxu0 0.0
  %144 = vmatpush1.msra.mxu0 0.0
  %145 = vmatprep.subr.mxu0 0.0
  %146 = vmatpush1.msra.mxu0 0.0
  %147 = vmatprep.subr.mxu0 0.0
  %148 = vmatpush1.msra.mxu0 0.0
  %149 = vmatprep.subr.mxu0 0.0
  %150 = vmatpush1.msra.mxu0 0.0
  %151 = vmatprep.subr.mxu0 0.0
  %152 = vmatpush1.msra.mxu0 0.0
  %153 = vmatprep.subr.mxu0 0.0
  %154 = vmatpush1.msra.mxu0 0.0
  %155 = vmatprep.subr.mxu0 0.0
  %156 = vmatpush1.msra.mxu0 0.0
  %157 = vmatprep.subr.mxu0 0.0
  %158 = vmatpush1.msra.mxu0 0.0
  %159 = vmatprep.subr.mxu0 0.0
  %160 = vmatpush1.msra.mxu0 0.0
  %161 = vmatprep.subr.mxu0 0.0
  %162 = vmatpush1.msra.mxu0 0.0
  %163 = vmatprep.subr.mxu0 0.0
  %164 = vmatpush1.msra.mxu0 0.0
  %165 = vmatprep.subr.mxu0 0.0
  %166 = vmatpush1.msra.mxu0 0.0
  %167 = vmatprep.subr.mxu0 0.0
  %168 = vmatpush1.msra.mxu0 0.0
  %169 = vmatprep.subr.mxu0 0.0
  %170 = vmatpush1.msra.mxu0 0.0
  %171 = vmatprep.subr.mxu0 0.0
  %172 = vmatpush1.msra.mxu0 0.0
  %173 = vmatprep.subr.mxu0 0.0
  %174 = vmatpush1.msra.mxu0 0.0
  %175 = vmatprep.subr.mxu0 0.0
  %176 = vmatpush1.msra.mxu0 0.0
  %177 = vmatprep.subr.mxu0 0.0
  %178 = vmatpush1.msra.mxu0 0.0
  %179 = vmatprep.subr.mxu0 0.0
  %180 = vmatpush1.msra.mxu0 0.0
  %181 = vmatprep.subr.mxu0 0.0
  %182 = vmatpush1.msra.mxu0 0.0
  %183 = vmatprep.subr.mxu0 0.0
  %184 = vmatpush1.msra.mxu0 0.0
  %185 = vmatprep.subr.mxu0 0.0
  %186 = vmatpush1.msra.mxu0 0.0
  %187 = vmatprep.subr.mxu0 0.0
  %188 = vmatpush1.msra.mxu0 0.0
  %189 = vmatprep.subr.mxu0 0.0
  %190 = vmatpush1.msra.mxu0 0.0
  %191 = vmatprep.mubr.f32.mxu0 0.0
  %192 = vmatmul.mubr.f32.gmra.mrb[0].mxu0 %v125
  %v193 = vpop.f32.mrb[0].mxu0
  %v194 = vadd.f32 %v121, %v193
  %v195 = vpop.f32.mrb[0].mxu0
  %196 = vdwg.mxu0
  %vm197 = vcmask 15360
  %198 = vst.msk [vmem:[%s5] sm:$0xff] %vm197, %v194
  // Predicated region
  $region22: #{qnetwork_forward.1} parent=0 // pred_check
    _
  $region23: #{qnetwork_forward.1} parent=0 // pred_check_branch
    %200 = sbr.rel (0) target = $region25
  $region24: #{qnetwork_forward.1} parent=0 // pred_region
    _
  $region25: #{qnetwork_forward.1} parent=0 // pred_fallthru
    _
  // Predicated region
  $region26: #{qnetwork_forward.1} parent=0 // pred_check
    _
  $region27: #{qnetwork_forward.1} parent=0 // pred_check_branch
    %202 = sbr.rel (0) target = $region29
  $region28: #{qnetwork_forward.1} parent=0 // pred_region
    _
  $region29: #{qnetwork_forward.1} parent=0 // pred_fallthru
    _

</llo_original>
